<compile_context>
chip_gen: v7x
topology: tpu7x:2x2x1
jax: 0.10.0
libtpu: 0.0.40
codegen_flags: <defaults>
</compile_context>

<pallas_src>
import functools

import jax
import jax.numpy as jnp
from jax.experimental import pallas as pl
from jax.experimental.pallas import tpu as pltpu

DROPOUT_P = 0.2


def _round_up(x, m):
    return (x + m - 1) // m * m


def _ffn_kernel(x_ref, w1_ref, b1_ref, w2_ref, b2_ref, *rest, training):
    if training:
        u_ref, o_ref = rest
    else:
        (o_ref,) = rest

    # MXU matmuls in bf16 with f32 accumulation; all elementwise work in f32
    # (keeps v5e's VPU happy and preserves accuracy of bias/ReLU/dropout).
    x = x_ref[...].astype(jnp.bfloat16)
    h = jnp.dot(x, w1_ref[...], preferred_element_type=jnp.float32) + b1_ref[...]
    h = jnp.maximum(h, 0.0)                                        # ReLU
    y = jnp.dot(h.astype(jnp.bfloat16), w2_ref[...],
                preferred_element_type=jnp.float32) + b2_ref[...]

    if training:
        keep_prob = 1.0 - DROPOUT_P
        inv_keep = 1.0 / keep_prob                                 # python const
        # fused inverted dropout: cmp + mul + select (3 VPU ops)
        y = jnp.where(u_ref[...] < keep_prob, y * inv_keep, 0.0)

    o_ref[...] = y.astype(o_ref.dtype)


def _pick_row_tile(m_rows, d_in_p, d_out_p, training,
                   budget_bytes=24 * 1024 * 1024):
    """Largest row tile whose pipeline VMEM footprint fits a conservative budget
    (safe under v7x's 64 MiB physical / 32 MiB default scoped VMEM)."""
    cap = max(8, _round_up(m_rows, 8))
    # resident weights (bf16, default double-buffered) + biases
    weights = 2 * (d_in_p * d_out_p + d_out_p * d_out_p) * 2 + 2 * 2 * d_out_p * 4
    for tm in (512, 384, 256, 128, 64, 32, 16, 8):
        if tm > cap:
            continue
        per_step = 2 * tm * d_in_p * 4          # x (double-buffered, f32)
        per_step += 2 * tm * d_out_p * 4        # out (double-buffered, f32)
        per_step += 2 * tm * d_out_p * 4        # f32 intermediates (h, y)
        if training:
            per_step += 2 * tm * d_out_p * 4    # dropout uniforms (double-buffered)
        if weights + per_step <= budget_bytes:
            return tm
    return min(8, cap)


def feed_forward(x, w1, b1, w2, b2, *, key=None, training=True):
    """x: (..., num_inputs) -> (..., num_outputs).  Matches
    Linear -> ReLU -> Linear -> Dropout(p=0.2)."""
    d_in = x.shape[-1]
    d_out = w1.shape[1]
    x2 = x.reshape(-1, d_in)
    m = x2.shape[0]

    # Lane-dense padding: feature dims to multiples of 128 (unmasked stores,
    # full MXU width).  Zero padding is exact: padded columns/rows contribute 0.
    d_in_p = _round_up(d_in, 128)
    d_out_p = _round_up(d_out, 128)

    tm = _pick_row_tile(m, d_in_p, d_out_p, training)
    m_p = _round_up(m, tm)

    x_p = jnp.zeros((m_p, d_in_p), x.dtype).at[:m, :d_in].set(x2)
    w1_p = jnp.zeros((d_in_p, d_out_p), jnp.bfloat16).at[:d_in, :d_out].set(
        w1.astype(jnp.bfloat16))
    w2_p = jnp.zeros((d_out_p, d_out_p), jnp.bfloat16).at[:d_out, :d_out].set(
        w2.astype(jnp.bfloat16))
    b1_p = jnp.zeros((1, d_out_p), jnp.float32).at[:, :d_out].set(
        b1.reshape(1, d_out).astype(jnp.float32))
    b2_p = jnp.zeros((1, d_out_p), jnp.float32).at[:, :d_out].set(
        b2.reshape(1, d_out).astype(jnp.float32))

    inputs = [x_p, w1_p, b1_p, w2_p, b2_p]
    in_specs = [
        pl.BlockSpec((tm, d_in_p), lambda i: (i, 0)),        # x: tiled along rows
        pl.BlockSpec((d_in_p, d_out_p), lambda i: (0, 0)),   # W1: VMEM-resident
        pl.BlockSpec((1, d_out_p), lambda i: (0, 0)),        # b1
        pl.BlockSpec((d_out_p, d_out_p), lambda i: (0, 0)),  # W2: VMEM-resident
        pl.BlockSpec((1, d_out_p), lambda i: (0, 0)),        # b2
    ]
    if training:
        if key is None:
            key = jax.random.PRNGKey(0)
        u = jax.random.uniform(key, (m_p, d_out_p), jnp.float32)
        inputs.append(u)
        in_specs.append(pl.BlockSpec((tm, d_out_p), lambda i: (i, 0)))

    out = pl.pallas_call(
        functools.partial(_ffn_kernel, training=training),
        out_shape=jax.ShapeDtypeStruct((m_p, d_out_p), x.dtype),
        grid_spec=pltpu.PrefetchScalarGridSpec(
            num_scalar_prefetch=0,
            grid=(m_p // tm,),
            in_specs=in_specs,
            out_specs=pl.BlockSpec((tm, d_out_p), lambda i: (i, 0)),
        ),
        compiler_params=pltpu.CompilerParams(
            dimension_semantics=("parallel",),      # rows independent -> megacore
            vmem_limit_bytes=48 * 1024 * 1024,      # headroom below v7x's 64 MiB
        ),
    )(*inputs)

    out = out[:m, :d_out]
    return out.reshape(*x.shape[:-1], d_out)


def init_linear_params(key, fan_in, fan_out):
    """Mimics torch.nn.Linear default init: U(-1/sqrt(fan_in), 1/sqrt(fan_in))."""
    kw, kb = jax.random.split(key)
    bound = 1.0 / jnp.sqrt(fan_in)
    w = jax.random.uniform(kw, (fan_in, fan_out), jnp.float32, -bound, bound)
    b = jax.random.uniform(kb, (1, fan_out), jnp.float32, -bound, bound)
    return w, b


if __name__ == "__main__":
    batch, seq = 2, 8
    num_inputs, num_outputs = 32, 64

    root = jax.random.PRNGKey(0)
    kx, k1, k2, kdrop = jax.random.split(root, 4)

    x = jax.random.normal(kx, (batch, seq, num_inputs), jnp.float32)
    w1, b1 = init_linear_params(k1, num_inputs, num_outputs)
    w2, b2 = init_linear_params(k2, num_outputs, num_outputs)

    # training-mode forward (dropout active, as in a freshly constructed nn.Module)
    y_train = jax.block_until_ready(
        feed_forward(x, w1, b1, w2, b2, key=kdrop, training=True))
    assert y_train.shape == (batch, seq, num_outputs)

    # eval-mode forward (dropout = identity) vs. a reference using the same
    # bf16-operand / f32-accumulate matmul numerics as the kernel
    y_eval = jax.block_until_ready(
        feed_forward(x, w1, b1, w2, b2, training=False))
    x2 = x.reshape(-1, num_inputs)
    h_ref = jnp.maximum(
        jnp.dot(x2.astype(jnp.bfloat16), w1.astype(jnp.bfloat16),
                preferred_element_type=jnp.float32) + b1, 0.0)
    ref = jnp.dot(h_ref.astype(jnp.bfloat16), w2.astype(jnp.bfloat16),
                  preferred_element_type=jnp.float32) + b2
    ref = ref.reshape(batch, seq, num_outputs).astype(y_eval.dtype)
    assert y_eval.shape == (batch, seq, num_outputs)
    assert jnp.allclose(y_eval, ref, atol=2e-2, rtol=2e-2)

    print("KERNEL_OK")
</pallas_src>

<mosaic_0001>
module attributes {stable_mosaic.version = 11 : i64} {
  func.func @_ffn_kernel(%arg0: i32, %arg1: memref<16x128xf32, #tpu.memory_space<vmem>>, %arg2: memref<128x128xbf16, #tpu.memory_space<vmem>>, %arg3: memref<1x128xf32, #tpu.memory_space<vmem>>, %arg4: memref<128x128xbf16, #tpu.memory_space<vmem>>, %arg5: memref<1x128xf32, #tpu.memory_space<vmem>>, %arg6: memref<16x128xf32, #tpu.memory_space<vmem>>, %arg7: memref<16x128xf32, #tpu.memory_space<vmem>>) attributes {dimension_semantics = [#tpu.dimension_semantics<parallel>], iteration_bounds = array<i64: 1>, scalar_prefetch = 0 : i64, scratch_operands = 0 : i64, tpu.core_type = #tpu.core_type<tc>, window_params = [{transform_indices = @transform_0, window_bounds = array<i64: 16, 128>}, {pipeline_mode = #tpu.pipeline_mode<synchronous>, transform_indices = @transform_1, window_bounds = array<i64: 128, 128>}, {pipeline_mode = #tpu.pipeline_mode<synchronous>, transform_indices = @transform_2, window_bounds = array<i64: 1, 128>}, {pipeline_mode = #tpu.pipeline_mode<synchronous>, transform_indices = @transform_3, window_bounds = array<i64: 128, 128>}, {pipeline_mode = #tpu.pipeline_mode<synchronous>, transform_indices = @transform_4, window_bounds = array<i64: 1, 128>}, {transform_indices = @transform_5, window_bounds = array<i64: 16, 128>}, {transform_indices = @transform_6, window_bounds = array<i64: 16, 128>}]} {
    %c0 = arith.constant 0 : index
    %c0_0 = arith.constant 0 : index
    %0 = vector.load %arg1[%c0, %c0_0] : memref<16x128xf32, #tpu.memory_space<vmem>>, vector<16x128xf32>
    %1 = arith.truncf %0 : vector<16x128xf32> to vector<16x128xbf16>
    %c0_1 = arith.constant 0 : index
    %c0_2 = arith.constant 0 : index
    %2 = vector.load %arg2[%c0_1, %c0_2] : memref<128x128xbf16, #tpu.memory_space<vmem>>, vector<128x128xbf16>
    %cst = arith.constant dense<0.000000e+00> : vector<16x128xf32>
    %3 = tpu.matmul %1, %2, %cst {dimension_numbers = #tpu.dot_dimension_numbers<[1], [0], [0], [1], [0, 0, 1, 1], [], []>} : vector<16x128xbf16>, vector<128x128xbf16>, vector<16x128xf32> -> vector<16x128xf32>
    %c0_3 = arith.constant 0 : index
    %c0_4 = arith.constant 0 : index
    %4 = vector.load %arg3[%c0_3, %c0_4] : memref<1x128xf32, #tpu.memory_space<vmem>>, vector<1x128xf32>
    %5 = vector.broadcast %4 : vector<1x128xf32> to vector<16x128xf32>
    %6 = arith.addf %3, %5 : vector<16x128xf32>
    %cst_5 = arith.constant 0.000000e+00 : f32
    %7 = vector.broadcast %cst_5 : f32 to vector<16x128xf32>
    %8 = arith.maximumf %6, %7 : vector<16x128xf32>
    %9 = arith.truncf %8 : vector<16x128xf32> to vector<16x128xbf16>
    %c0_6 = arith.constant 0 : index
    %c0_7 = arith.constant 0 : index
    %10 = vector.load %arg4[%c0_6, %c0_7] : memref<128x128xbf16, #tpu.memory_space<vmem>>, vector<128x128xbf16>
    %cst_8 = arith.constant dense<0.000000e+00> : vector<16x128xf32>
    %11 = tpu.matmul %9, %10, %cst_8 {dimension_numbers = #tpu.dot_dimension_numbers<[1], [0], [0], [1], [0, 0, 1, 1], [], []>} : vector<16x128xbf16>, vector<128x128xbf16>, vector<16x128xf32> -> vector<16x128xf32>
    %c0_9 = arith.constant 0 : index
    %c0_10 = arith.constant 0 : index
    %12 = vector.load %arg5[%c0_9, %c0_10] : memref<1x128xf32, #tpu.memory_space<vmem>>, vector<1x128xf32>
    %13 = vector.broadcast %12 : vector<1x128xf32> to vector<16x128xf32>
    %14 = arith.addf %11, %13 : vector<16x128xf32>
    %c0_11 = arith.constant 0 : index
    %c0_12 = arith.constant 0 : index
    %15 = vector.load %arg6[%c0_11, %c0_12] : memref<16x128xf32, #tpu.memory_space<vmem>>, vector<16x128xf32>
    %cst_13 = arith.constant 8.000000e-01 : f32
    %16 = vector.broadcast %cst_13 : f32 to vector<16x128xf32>
    %17 = arith.cmpf olt, %15, %16 : vector<16x128xf32>
    %cst_14 = arith.constant 1.250000e+00 : f32
    %18 = vector.broadcast %cst_14 : f32 to vector<16x128xf32>
    %19 = arith.mulf %14, %18 : vector<16x128xf32>
    %cst_15 = arith.constant 0.000000e+00 : f32
    %20 = vector.broadcast %cst_15 : f32 to vector<16x128xf32>
    %21 = arith.select %17, %19, %20 : vector<16x128xi1>, vector<16x128xf32>
    %c0_16 = arith.constant 0 : index
    %c0_17 = arith.constant 0 : index
    %22 = vector.load %arg7[%c0_16, %c0_17] : memref<16x128xf32, #tpu.memory_space<vmem>>, vector<16x128xf32>
    tpu.vector_store %arg7[%c0_16, %c0_17], %21 {strides = array<i32>} : memref<16x128xf32, #tpu.memory_space<vmem>>, vector<16x128xf32>,
    return
  }
  func.func @transform_0(%arg0: i32) -> (i32, i32) {
    %c0_i32 = arith.constant 0 : i32
    %c0_i32_0 = arith.constant 0 : i32
    return %arg0, %c0_i32 : i32, i32
  }
  func.func @transform_1(%arg0: i32) -> (i32, i32) {
    %c0_i32 = arith.constant 0 : i32
    %c0_i32_0 = arith.constant 0 : i32
    %c0_i32_1 = arith.constant 0 : i32
    return %c0_i32, %c0_i32_0 : i32, i32
  }
  func.func @transform_2(%arg0: i32) -> (i32, i32) {
    %c0_i32 = arith.constant 0 : i32
    %c0_i32_0 = arith.constant 0 : i32
    %c0_i32_1 = arith.constant 0 : i32
    return %c0_i32, %c0_i32_0 : i32, i32
  }
  func.func @transform_3(%arg0: i32) -> (i32, i32) {
    %c0_i32 = arith.constant 0 : i32
    %c0_i32_0 = arith.constant 0 : i32
    %c0_i32_1 = arith.constant 0 : i32
    return %c0_i32, %c0_i32_0 : i32, i32
  }
  func.func @transform_4(%arg0: i32) -> (i32, i32) {
    %c0_i32 = arith.constant 0 : i32
    %c0_i32_0 = arith.constant 0 : i32
    %c0_i32_1 = arith.constant 0 : i32
    return %c0_i32, %c0_i32_0 : i32, i32
  }
  func.func @transform_5(%arg0: i32) -> (i32, i32) {
    %c0_i32 = arith.constant 0 : i32
    %c0_i32_0 = arith.constant 0 : i32
    return %arg0, %c0_i32 : i32, i32
  }
  func.func @transform_6(%arg0: i32) -> (i32, i32) {
    %c0_i32 = arith.constant 0 : i32
    %c0_i32_0 = arith.constant 0 : i32
    return %arg0, %c0_i32 : i32, i32
  }
}

</mosaic_0001>

<llo_original>
// kernel: tpu_custom_call.1
$region0: #{tpu_custom_call.1}
  #allocation0 [shape = 'u32[]', space=smem, size = 0x4, offset = 0x4, fixed_abs, tag = 'smem constant byte address 0x4 - core index']
  #allocation1 [shape = 'u32[144,128]{1,0:T(1,128)}', space=vmem, size = 0x12000, scoped, tag = 'internal scratch']
  %s0 = inlined_call_operand.hbm [shape: f32[16,128], index: 0, kind: input, shape index: {}]
  %s1 = inlined_call_operand.hbm [shape: bf16[128,128], index: 1, kind: input, shape index: {}]
  %s2 = inlined_call_operand.vmem [shape: f32[1,128], index: 2, kind: input, shape index: {}]
  %s3 = inlined_call_operand.hbm [shape: bf16[128,128], index: 3, kind: input, shape index: {}]
  %s4 = inlined_call_operand.vmem [shape: f32[1,128], index: 4, kind: input, shape index: {}]
  %s5 = inlined_call_operand.vmem [shape: f32[16,128], index: 5, kind: input, shape index: {}]
  %s6 = inlined_call_operand.hbm [shape: f32[16,128], index: 6, kind: output, shape index: {}]
  %s7 = sld [smem:[#allocation0]]
  $region46: #{tpu_custom_call.1} parent=0
    _
  %s9 = ssub.s32 1, %s7
  %s10 = scalar_select 0, %s9, %s7
  $region1: #{tpu_custom_call.1} parent=0
    #allocation2 [shape = 'u8[8192]{0}', space=vmem, size = 0x2000, scoped, tag = 'input window, operand 0, single buffered']
    #allocation3 [shape = 's32[1]{0}', space=sflag, size = 0x4, scoped, tag = 'scoped memory for tpu_custom_call.1']
    #allocation4 [shape = 's32[1]{0}', space=sflag, size = 0x4, scoped, tag = 'scoped memory for tpu_custom_call.1']
    #allocation5 [shape = 'u8[32768]{0}', space=vmem, size = 0x8000, scoped, tag = 'input window, operand 1, single buffered']
    #allocation6 [shape = 's32[1]{0}', space=sflag, size = 0x4, scoped, tag = 'scoped memory for tpu_custom_call.1']
    #allocation7 [shape = 'u8[32768]{0}', space=vmem, size = 0x8000, scoped, tag = 'input window, operand 3, single buffered']
    #allocation8 [shape = 'u8[8192]{0}', space=vmem, size = 0x2000, scoped, tag = 'output window, operand 0, single buffered']
    %11 = vsyncpa [#allocation3], 0
    %12 = vsyncpa [#allocation6], 0
    %13 = vsyncpa [#allocation4], 0
    // Predicated region
    $region2: #{tpu_custom_call.1} parent=1 // pred_check
      _
    $region3: #{tpu_custom_call.1} parent=1 // pred_check_branch
      %15 = sbr.rel (0) target = $region5
    $region4: #{tpu_custom_call.1} parent=1 // pred_region
      %s17 = ssub.s32 256, 256
      %18 = vsyncadd [#allocation3], %s17
      %s19 = sshll.u32 [#allocation2], 4
      %s20 = int_to_ptr.vmem [resolvable:$true] %s19
      %25 = dma.hbm_to_vmem [thread:$0]  %s0, 256, %s20, [#allocation3], 128, 128, 8
    $region5: #{tpu_custom_call.1} parent=1 // pred_fallthru
      _
    // Predicated region
    $region6: #{tpu_custom_call.1} parent=1 // pred_check
      _
    $region7: #{tpu_custom_call.1} parent=1 // pred_check_branch
      %27 = sbr.rel (0) target = $region9
    $region8: #{tpu_custom_call.1} parent=1 // pred_region
      %s29 = ssub.s32 1024, 1024
      %30 = vsyncadd [#allocation6], %s29
      %s31 = sshll.u32 [#allocation5], 4
      %s32 = int_to_ptr.vmem [resolvable:$true] %s31
      %37 = dma.hbm_to_vmem [thread:$0]  %s1, 1024, %s32, [#allocation6], 64, 64, 4
    $region9: #{tpu_custom_call.1} parent=1 // pred_fallthru
      _
    // Predicated region
    $region10: #{tpu_custom_call.1} parent=1 // pred_check
      _
    $region11: #{tpu_custom_call.1} parent=1 // pred_check_branch
      %39 = sbr.rel (0) target = $region13
    $region12: #{tpu_custom_call.1} parent=1 // pred_region
      _
    $region13: #{tpu_custom_call.1} parent=1 // pred_fallthru
      _
    // Predicated region
    $region14: #{tpu_custom_call.1} parent=1 // pred_check
      _
    $region15: #{tpu_custom_call.1} parent=1 // pred_check_branch
      %41 = sbr.rel (0) target = $region17
    $region16: #{tpu_custom_call.1} parent=1 // pred_region
      %s43 = ssub.s32 1024, 1024
      %44 = vsyncadd [#allocation6], %s43
      %s45 = sshll.u32 [#allocation7], 4
      %s46 = int_to_ptr.vmem [resolvable:$true] %s45
      %51 = dma.hbm_to_vmem [thread:$0]  %s3, 1024, %s46, [#allocation6], 64, 64, 4
    $region17: #{tpu_custom_call.1} parent=1 // pred_fallthru
      _
    // Predicated region
    $region18: #{tpu_custom_call.1} parent=1 // pred_check
      _
    $region19: #{tpu_custom_call.1} parent=1 // pred_check_branch
      %53 = sbr.rel (0) target = $region21
    $region20: #{tpu_custom_call.1} parent=1 // pred_region
      _
    $region21: #{tpu_custom_call.1} parent=1 // pred_fallthru
      _
    // Predicated region
    $region22: #{tpu_custom_call.1} parent=1 // pred_check
      _
    $region23: #{tpu_custom_call.1} parent=1 // pred_check_branch
      %55 = sbr.rel (0) target = $region25
    $region24: #{tpu_custom_call.1} parent=1 // pred_region
      _
    $region25: #{tpu_custom_call.1} parent=1 // pred_fallthru
      _
    // Predicated region
    $region26: #{tpu_custom_call.1} parent=1 // pred_check
      _
    $region27: #{tpu_custom_call.1} parent=1 // pred_check_branch
      %57 = sbr.rel (0) target = $region29
    $region28: #{tpu_custom_call.1} parent=1 // pred_region
      %58 = dma.done [#allocation3], 256
    $region29: #{tpu_custom_call.1} parent=1 // pred_fallthru
      _
    // Predicated region
    $region30: #{tpu_custom_call.1} parent=1 // pred_check
      _
    $region31: #{tpu_custom_call.1} parent=1 // pred_check_branch
      %60 = sbr.rel (0) target = $region33
    $region32: #{tpu_custom_call.1} parent=1 // pred_region
      %61 = dma.done [#allocation6], 1024
    $region33: #{tpu_custom_call.1} parent=1 // pred_fallthru
      _
    // Predicated region
    $region34: #{tpu_custom_call.1} parent=1 // pred_check
      _
    $region35: #{tpu_custom_call.1} parent=1 // pred_check_branch
      %63 = sbr.rel (0) target = $region37
    $region36: #{tpu_custom_call.1} parent=1 // pred_region
      %64 = dma.done [#allocation6], 1024
    $region37: #{tpu_custom_call.1} parent=1 // pred_fallthru
      _
    %v66 = vld [vmem:[#allocation2] sm:$0xff]
    %v67 = vld [vmem:[#allocation2 + $0x8] sm:$0xff]
    %v68 = vpack.c.bf16 %v67, %v66
    %v69 = vld [vmem:[#allocation5] sm:$0xf]
    %v70 = vld [vmem:[#allocation5 + $0x4] sm:$0xf]
    %v71 = vld [vmem:[#allocation5 + $0x8] sm:$0xf]
    %v72 = vld [vmem:[#allocation5 + $0xc] sm:$0xf]
    %v73 = vld [vmem:[#allocation5 + $0x10] sm:$0xf]
    %v74 = vld [vmem:[#allocation5 + $0x14] sm:$0xf]
    %v75 = vld [vmem:[#allocation5 + $0x18] sm:$0xf]
    %v76 = vld [vmem:[#allocation5 + $0x1c] sm:$0xf]
    %v77 = vld [vmem:[#allocation5 + $0x20] sm:$0xf]
    %v78 = vld [vmem:[#allocation5 + $0x24] sm:$0xf]
    %v79 = vld [vmem:[#allocation5 + $0x28] sm:$0xf]
    %v80 = vld [vmem:[#allocation5 + $0x2c] sm:$0xf]
    %v81 = vld [vmem:[#allocation5 + $0x30] sm:$0xf]
    %v82 = vld [vmem:[#allocation5 + $0x34] sm:$0xf]
    %v83 = vld [vmem:[#allocation5 + $0x38] sm:$0xf]
    %v84 = vld [vmem:[#allocation5 + $0x3c] sm:$0xf]
    %v85 = vld [vmem:[%s2] sm:$0x1]
    %v87 = vlaneseq
    %v88 = vshrl.u32 %v87, 7
    %v89 = vsub.s32 0, %v88
    %v90 = vrot.slane %v85, %v89
    %v108 = vunpack.c.l.b16 %v69
    %v109 = vunpack.c.l.b16 %v70
    %v110 = vunpack.c.l.b16 %v71
    %v111 = vunpack.c.l.b16 %v72
    %v112 = vunpack.c.l.b16 %v73
    %v113 = vunpack.c.l.b16 %v74
    %v114 = vunpack.c.l.b16 %v75
    %v115 = vunpack.c.l.b16 %v76
    %v116 = vunpack.c.l.b16 %v77
    %v117 = vunpack.c.l.b16 %v78
    %v118 = vunpack.c.l.b16 %v79
    %v119 = vunpack.c.l.b16 %v80
    %v120 = vunpack.c.l.b16 %v81
    %v121 = vunpack.c.l.b16 %v82
    %v122 = vunpack.c.l.b16 %v83
    %v123 = vunpack.c.l.b16 %v84
    %v124 = vpack.c.b16 %v109, %v108
    %v125 = vpack.c.b16 %v111, %v110
    %v126 = vpack.c.b16 %v113, %v112
    %v127 = vpack.c.b16 %v115, %v114
    %v128 = vpack.c.b16 %v117, %v116
    %v129 = vpack.c.b16 %v119, %v118
    %v130 = vpack.c.b16 %v121, %v120
    %v131 = vpack.c.b16 %v123, %v122
    %140 = vmatprep.subr.bf16.mxu0 0
    %141 = vmatpush1.bf16.msra.mxu0 %v124
    %142 = vmatprep.subr.bf16.mxu0 0
    %143 = vmatpush1.bf16.msra.mxu0 %v125
    %144 = vmatprep.subr.bf16.mxu0 0
    %145 = vmatpush1.bf16.msra.mxu0 %v126
    %146 = vmatprep.subr.bf16.mxu0 0
    %147 = vmatpush1.bf16.msra.mxu0 %v127
    %148 = vmatprep.subr.bf16.mxu0 0
    %149 = vmatpush1.bf16.msra.mxu0 %v128
    %150 = vmatprep.subr.bf16.mxu0 0
    %151 = vmatpush1.bf16.msra.mxu0 %v129
    %152 = vmatprep.subr.bf16.mxu0 0
    %153 = vmatpush1.bf16.msra.mxu0 %v130
    %154 = vmatprep.subr.bf16.mxu0 0
    %155 = vmatpush1.bf16.msra.mxu0 %v131
    %156 = vmatprep.subr.bf16.mxu0 0
    %157 = vmatpush1.bf16.msra.mxu0 0
    %158 = vmatprep.subr.bf16.mxu0 0
    %159 = vmatpush1.bf16.msra.mxu0 0
    %160 = vmatprep.subr.bf16.mxu0 0
    %161 = vmatpush1.bf16.msra.mxu0 0
    %162 = vmatprep.subr.bf16.mxu0 0
    %163 = vmatpush1.bf16.msra.mxu0 0
    %164 = vmatprep.subr.bf16.mxu0 0
    %165 = vmatpush1.bf16.msra.mxu0 0
    %166 = vmatprep.subr.bf16.mxu0 0
    %167 = vmatpush1.bf16.msra.mxu0 0
    %168 = vmatprep.subr.bf16.mxu0 0
    %169 = vmatpush1.bf16.msra.mxu0 0
    %170 = vmatprep.subr.bf16.mxu0 0
    %171 = vmatpush1.bf16.msra.mxu0 0
    %172 = vmatprep.mubr.bf16.mxu0 0
    %173 = vmatmul.mubr.bf16.gmra.mrb[0].mxu0 %v68
    %v174 = vpop.f32.mrb[0].mxu0
    %v175 = vadd.f32 %v90, %v174
    %v176 = vpop.f32.mrb[0].mxu0
    %v177 = vpop.f32.mrb[0].mxu0
    %v178 = vadd.f32 %v90, %v177
    %v179 = vpop.f32.mrb[0].mxu0
    %180 = vdwg.mxu0
    %v181 = vmax.f32 %v175, 0.0
    %v182 = vmax.f32 %v178, 0.0
    %v183 = vpack.c.bf16 %v182, %v181
    %v184 = vld [vmem:[#allocation7] sm:$0xf]
    %v185 = vld [vmem:[#allocation7 + $0x4] sm:$0xf]
    %v186 = vld [vmem:[#allocation7 + $0x8] sm:$0xf]
    %v187 = vld [vmem:[#allocation7 + $0xc] sm:$0xf]
    %v188 = vld [vmem:[#allocation7 + $0x10] sm:$0xf]
    %v189 = vld [vmem:[#allocation7 + $0x14] sm:$0xf]
    %v190 = vld [vmem:[#allocation7 + $0x18] sm:$0xf]
    %v191 = vld [vmem:[#allocation7 + $0x1c] sm:$0xf]
    %v192 = vld [vmem:[#allocation7 + $0x20] sm:$0xf]
    %v193 = vld [vmem:[#allocation7 + $0x24] sm:$0xf]
    %v194 = vld [vmem:[#allocation7 + $0x28] sm:$0xf]
    %v195 = vld [vmem:[#allocation7 + $0x2c] sm:$0xf]
    %v196 = vld [vmem:[#allocation7 + $0x30] sm:$0xf]
    %v197 = vld [vmem:[#allocation7 + $0x34] sm:$0xf]
    %v198 = vld [vmem:[#allocation7 + $0x38] sm:$0xf]
    %v199 = vld [vmem:[#allocation7 + $0x3c] sm:$0xf]
    %v200 = vld [vmem:[%s4] sm:$0x1]
    %v202 = vlaneseq
    %v203 = vshrl.u32 %v202, 7
    %v204 = vsub.s32 0, %v203
    %v205 = vrot.slane %v200, %v204
    %v223 = vunpack.c.l.b16 %v184
    %v224 = vunpack.c.l.b16 %v185
    %v225 = vunpack.c.l.b16 %v186
    %v226 = vunpack.c.l.b16 %v187
    %v227 = vunpack.c.l.b16 %v188
    %v228 = vunpack.c.l.b16 %v189
    %v229 = vunpack.c.l.b16 %v190
    %v230 = vunpack.c.l.b16 %v191
    %v231 = vunpack.c.l.b16 %v192
    %v232 = vunpack.c.l.b16 %v193
    %v233 = vunpack.c.l.b16 %v194
    %v234 = vunpack.c.l.b16 %v195
    %v235 = vunpack.c.l.b16 %v196
    %v236 = vunpack.c.l.b16 %v197
    %v237 = vunpack.c.l.b16 %v198
    %v238 = vunpack.c.l.b16 %v199
    %v239 = vpack.c.b16 %v224, %v223
    %v240 = vpack.c.b16 %v226, %v225
    %v241 = vpack.c.b16 %v228, %v227
    %v242 = vpack.c.b16 %v230, %v229
    %v243 = vpack.c.b16 %v232, %v231
    %v244 = vpack.c.b16 %v234, %v233
    %v245 = vpack.c.b16 %v236, %v235
    %v246 = vpack.c.b16 %v238, %v237
    %255 = vmatprep.subr.bf16.mxu0 0
    %256 = vmatpush1.bf16.msra.mxu0 %v239
    %257 = vmatprep.subr.bf16.mxu0 0
    %258 = vmatpush1.bf16.msra.mxu0 %v240
    %259 = vmatprep.subr.bf16.mxu0 0
    %260 = vmatpush1.bf16.msra.mxu0 %v241
    %261 = vmatprep.subr.bf16.mxu0 0
    %262 = vmatpush1.bf16.msra.mxu0 %v242
    %263 = vmatprep.subr.bf16.mxu0 0
    %264 = vmatpush1.bf16.msra.mxu0 %v243
    %265 = vmatprep.subr.bf16.mxu0 0
    %266 = vmatpush1.bf16.msra.mxu0 %v244
    %267 = vmatprep.subr.bf16.mxu0 0
    %268 = vmatpush1.bf16.msra.mxu0 %v245
    %269 = vmatprep.subr.bf16.mxu0 0
    %270 = vmatpush1.bf16.msra.mxu0 %v246
    %271 = vmatprep.subr.bf16.mxu0 0
    %272 = vmatpush1.bf16.msra.mxu0 0
    %273 = vmatprep.subr.bf16.mxu0 0
    %274 = vmatpush1.bf16.msra.mxu0 0
    %275 = vmatprep.subr.bf16.mxu0 0
    %276 = vmatpush1.bf16.msra.mxu0 0
    %277 = vmatprep.subr.bf16.mxu0 0
    %278 = vmatpush1.bf16.msra.mxu0 0
    %279 = vmatprep.subr.bf16.mxu0 0
    %280 = vmatpush1.bf16.msra.mxu0 0
    %281 = vmatprep.subr.bf16.mxu0 0
    %282 = vmatpush1.bf16.msra.mxu0 0
    %283 = vmatprep.subr.bf16.mxu0 0
    %284 = vmatpush1.bf16.msra.mxu0 0
    %285 = vmatprep.subr.bf16.mxu0 0
    %286 = vmatpush1.bf16.msra.mxu0 0
    %287 = vmatprep.mubr.bf16.mxu0 0
    %288 = vmatmul.mubr.bf16.gmra.mrb[0].mxu0 %v183
    %v289 = vpop.f32.mrb[0].mxu0
    %v290 = vadd.f32 %v205, %v289
    %v291 = vpop.f32.mrb[0].mxu0
    %v292 = vpop.f32.mrb[0].mxu0
    %v293 = vadd.f32 %v205, %v292
    %v294 = vpop.f32.mrb[0].mxu0
    %295 = vdwg.mxu0
    %v296 = vld [vmem:[%s5] sm:$0xff]
    %v297 = vld [vmem:[%s5 + $0x8] sm:$0xff]
    %vm298 = vcmp.lt.f32.partialorder %v296, 0.8
    %vm299 = vcmp.lt.f32.partialorder %v297, 0.8
    %v300 = vmul.f32 %v290, 1.25
    %v301 = vmul.f32 %v293, 1.25
    %v302 = vsel %vm298, %v300, 0.0
    %v303 = vsel %vm299, %v301, 0.0
    %304 = vst [vmem:[#allocation8] sm:$0xff] %v302
    %305 = vst [vmem:[#allocation8 + $0x8] sm:$0xff] %v303
    // Predicated region
    $region38: #{tpu_custom_call.1} parent=1 // pred_check
      _
    $region39: #{tpu_custom_call.1} parent=1 // pred_check_branch
      %307 = sbr.rel (0) target = $region41
    $region40: #{tpu_custom_call.1} parent=1 // pred_region
      %s309 = ssub.s32 256, 256
      %310 = vsyncadd [#allocation4], %s309
      %s311 = sshll.u32 [#allocation8], 4
      %s312 = int_to_ptr.vmem [resolvable:$true] %s311
      %317 = dma.vmem_to_hbm [thread:$0]  %s312, 256, %s6, [#allocation4], 128, 128, 8
    $region41: #{tpu_custom_call.1} parent=1 // pred_fallthru
      _
    // Predicated region
    $region42: #{tpu_custom_call.1} parent=1 // pred_check
      _
    $region43: #{tpu_custom_call.1} parent=1 // pred_check_branch
      %319 = sbr.rel (0) target = $region45
    $region44: #{tpu_custom_call.1} parent=1 // pred_region
      %320 = dma.done [#allocation4], 256
    $region45: #{tpu_custom_call.1} parent=1 // pred_fallthru
      _
    %321 = vsyncpa [#allocation3], 1
    %322 = vsyncpa [#allocation6], 1
    %323 = vsyncpa [#allocation4], 1

</llo_original>
